<compile_context>
chip_gen: v7x
topology: tpu7x:2x2x1
jax: 0.10.0
libtpu: 0.0.40
codegen_flags: <defaults>
</compile_context>

<pallas_src>
import functools

import jax
import jax.numpy as jnp
from jax.experimental import pallas as pl
from jax.experimental.pallas import tpu as pltpu


_LANE = 128
_SUBLANE = 8
_ONEHOT_BLOCK_V = 512          # vocab chunk for the one-hot MXU fallback
_DEFAULT_BLOCK_TOKENS = 256    # TQ target for D ~ 128 (measured sweet spot 256-512)


def _round_up(x: int, m: int) -> int:
    return ((x + m - 1) // m) * m


def _cdiv(a: int, b: int) -> int:
    return (a + b - 1) // b


def _vmem_capacity_bytes() -> int:
    """Per-TensorCore VMEM capacity; conservative 64 MiB (v7x) if the query fails."""
    try:
        cap = int(getattr(pltpu.get_tpu_info(), "vmem_capacity_bytes", 0))
        if cap > 0:
            return cap
    except Exception:
        pass
    return 64 << 20


# ---------------------------------------------------------------------------
# Kernels
# ---------------------------------------------------------------------------

def _gather_take_kernel(ids_ref, table_ref, out_ref):
    """Vectorized sublane gather: out[t, :] = table[ids[t], :]."""
    ids = ids_ref[...]                                   # (TQ, 1) int32
    idx = jnp.broadcast_to(ids, out_ref.shape)           # (TQ, D)
    out_ref[...] = jnp.take_along_axis(
        table_ref[...], idx, axis=0, mode="promise_in_bounds"
    ).astype(out_ref.dtype)


def _gather_onehot_kernel(ids_ref, table_ref, out_ref, *, vocab_size, block_v, precision):
    """MXU one-hot gather: out = onehot(ids) @ table, statically chunked over the vocab."""
    ids = ids_ref[...]                                   # (TQ, 1) int32
    tq, d = out_ref.shape
    compute_dtype = jnp.bfloat16 if table_ref.dtype == jnp.bfloat16 else jnp.float32
    one = jnp.asarray(1, compute_dtype)
    zero = jnp.asarray(0, compute_dtype)

    acc = jnp.zeros((tq, d), jnp.float32)
    v0 = 0
    while v0 < vocab_size:                               # static Python unroll over vocab chunks
        vc = min(block_v, vocab_size - v0)
        tab = table_ref[v0:v0 + vc, :].astype(compute_dtype)          # (vc, D)
        iota = jax.lax.broadcasted_iota(jnp.int32, (tq, vc), 1) + v0  # (TQ, vc)
        hot = jnp.where(ids == iota, one, zero)                       # exact 0/1 one-hot
        acc = acc + jnp.dot(hot, tab,
                            preferred_element_type=jnp.float32,
                            precision=precision)
        v0 += vc
    out_ref[...] = acc.astype(out_ref.dtype)


# ---------------------------------------------------------------------------
# pallas_call builder + mode selection
# ---------------------------------------------------------------------------

@functools.lru_cache(maxsize=None)
def _build_gather_fn(n_tokens: int, vocab: int, dim: int, dtype_name: str,
                     block_tokens: int, mode: str, vmem_limit: int):
    dtype = jnp.dtype(dtype_name)
    num_blocks = n_tokens // block_tokens

    if mode == "take":
        kernel = _gather_take_kernel
    else:
        kernel = functools.partial(
            _gather_onehot_kernel,
            vocab_size=vocab,
            block_v=min(_ONEHOT_BLOCK_V, vocab),
            precision=(None if dtype == jnp.bfloat16 else jax.lax.Precision.HIGHEST),
        )

    call = pl.pallas_call(
        kernel,
        out_shape=jax.ShapeDtypeStruct((n_tokens, dim), dtype),
        grid=(num_blocks,),
        in_specs=[
            # Per-block token ids: (TQ, 1) int32 VMEM tile (vector operand of the gather).
            pl.BlockSpec((block_tokens, 1), lambda i: (i, 0)),
            # Whole table resident in VMEM, single-buffered (not pipelined).
            pl.BlockSpec(memory_space=pltpu.MemorySpace.VMEM),
        ],
        # Dense, lane-dense (TQ, Dp) output tiles (Dp is a multiple of 128).
        out_specs=pl.BlockSpec((block_tokens, dim), lambda i: (i, 0)),
        compiler_params=pltpu.CompilerParams(
            dimension_semantics=("parallel",),   # independent grid steps (v7x megacore)
            vmem_limit_bytes=vmem_limit,
        ),
    )
    return jax.jit(call)


@functools.lru_cache(maxsize=None)
def _select_gather_mode(n_tokens: int, vocab: int, dim: int, dtype_name: str,
                        block_tokens: int, vmem_limit: int) -> str:
    """Prefer the vectorized take/gather kernel; fall back to the exact one-hot MXU kernel if
    the gather pattern does not lower (dtype / generation dependent) or fails a numeric check."""
    dtype = jnp.dtype(dtype_name)
    try:
        fn = _build_gather_fn(n_tokens, vocab, dim, dtype_name, block_tokens, "take", vmem_limit)
        compiled = fn.lower(
            jax.ShapeDtypeStruct((n_tokens, 1), jnp.int32),
            jax.ShapeDtypeStruct((vocab, dim), dtype),
        ).compile()
        # Cheap one-time numeric self-check: row r of the test table holds the value (r % 128)
        # (exactly representable in every supported dtype).
        test_ids = (jnp.arange(n_tokens, dtype=jnp.int32) % vocab).reshape(n_tokens, 1)
        test_tab = jnp.broadcast_to(
            (jnp.arange(vocab, dtype=jnp.int32) % 128)[:, None], (vocab, dim)).astype(dtype)
        got = compiled(test_ids, test_tab)
        want = jnp.broadcast_to((test_ids % 128).astype(dtype), got.shape)
        return "take" if bool(jnp.all(got == want)) else "onehot"
    except Exception:
        return "onehot"


# ---------------------------------------------------------------------------
# Public wrapper
# ---------------------------------------------------------------------------

def embedding_lookup(embedding_mat: jax.Array, token_ids: jax.Array,
                     *, block_tokens: int = _DEFAULT_BLOCK_TOKENS,
                     gather_mode: str = "auto") -> jax.Array:
    """Equivalent of `embedding_mat[token_ids]` for integer token_ids of any shape.

    NOTE: out-of-range ids are clamped to [0, V-1]; torch.nn.Embedding raises instead.
    """
    V, D = embedding_mat.shape
    out_dtype = embedding_mat.dtype
    ids_shape = tuple(token_ids.shape)
    N = 1
    for s in ids_shape:
        N *= int(s)
    if N == 0:
        return jnp.zeros((*ids_shape, D), dtype=out_dtype)

    ids = jnp.clip(token_ids.reshape(-1).astype(jnp.int32), 0, V - 1)

    # Lane-dense output tiles: pad D up to a multiple of 128 (padded columns sliced off below).
    Dp = _round_up(D, _LANE)
    table = embedding_mat if Dp == D else jnp.pad(embedding_mat, ((0, 0), (0, Dp - D)))

    itemsize = jnp.dtype(out_dtype).itemsize
    table_bytes = V * Dp * itemsize

    cap = _vmem_capacity_bytes()                 # 128 MiB (v5e/v6e) / 64 MiB per TC (v7x)
    vmem_limit = int(cap - (4 << 20))
    budget = vmem_limit - (4 << 20)              # headroom for Mosaic internal scratch

    # Per-token VMEM cost: 2x pipelined out-tile rows + 2x (lane-padded) ids rows
    # + one-hot chunk + f32 accumulator rows.
    per_token = 2 * Dp * itemsize + 2 * _LANE * 4 + min(_ONEHOT_BLOCK_V, V) * 4 + Dp * 4
    avail = budget - table_bytes                 # table is single-buffered -> 1x table_bytes
    if avail < _SUBLANE * per_token:
        # TODO(synk): large-vocab path — keep the table in HBM (memory_space=pl.ANY) and gather
        # rows with a deep (>=8 outstanding) manually multi-buffered pltpu.make_async_copy ring.
        raise NotImplementedError(
            "Embedding table does not fit the VMEM-resident fast path "
            f"(table={table_bytes >> 20} MiB, per-core VMEM={cap >> 20} MiB).")

    # Tokens per grid step: big enough to amortize the ~0.35 us/step pipeline overhead, small
    # enough that the output double-buffers fit next to the resident table, and small enough to
    # give >= 2 grid steps so both v7x TensorCores get work.
    tq = min(block_tokens, (avail // per_token) // _SUBLANE * _SUBLANE)
    tq = min(tq, _round_up(_cdiv(N, 2), _SUBLANE))
    tq = max(tq, _SUBLANE)

    n_pad = _round_up(N, tq)
    if n_pad != N:
        ids = jnp.pad(ids, (0, n_pad - N))       # padded slots gather row 0; sliced off below
    ids2d = ids.reshape(n_pad, 1)

    dtype_name = jnp.dtype(out_dtype).name
    mode = gather_mode
    if mode == "auto":
        mode = _select_gather_mode(n_pad, V, Dp, dtype_name, tq, vmem_limit)
    elif mode not in ("take", "onehot"):
        raise ValueError(f"unknown gather_mode: {gather_mode!r}")

    fn = _build_gather_fn(n_pad, V, Dp, dtype_name, tq, mode, vmem_limit)
    out = fn(ids2d, table)

    return out[:N, :D].reshape(*ids_shape, D)


if __name__ == "__main__":
    key = jax.random.PRNGKey(0)
    k_emb, k_ids = jax.random.split(key)

    # Module shapes: num_embeddings=64 (vocab), embedding_dim=128; small token batch (2, 8).
    V, D = 64, 128
    B, S = 2, 8

    # Deterministic init matching torch.nn.init.trunc_normal_ defaults
    # (mean=0, std=1, truncated to [-2, 2]).
    embedding_mat = jax.random.truncated_normal(
        k_emb, -2.0, 2.0, (V, D), dtype=jnp.float32)
    token_ids = jax.random.randint(k_ids, (B, S), 0, V, dtype=jnp.int32)

    out = embedding_lookup(embedding_mat, token_ids)
    out = jax.block_until_ready(out)

    # Reference: plain JAX gather (same semantics as embedding_mat[token_ids]).
    ref = embedding_mat[token_ids]
    assert out.shape == (B, S, D), out.shape
    assert out.dtype == embedding_mat.dtype, out.dtype
    max_err = float(jnp.max(jnp.abs(out - ref)))
    assert jnp.allclose(out, ref, rtol=0.0, atol=1e-5), f"max abs err {max_err}"

    print("KERNEL_OK")
</pallas_src>

<mosaic_0001>
module attributes {stable_mosaic.version = 11 : i64} {
  func.func @_gather_onehot_kernel(%arg0: i32, %arg1: memref<8x1xi32, #tpu.memory_space<vmem>>, %arg2: memref<64x128xf32, #tpu.memory_space<vmem>>, %arg3: memref<8x128xf32, #tpu.memory_space<vmem>>) attributes {dimension_semantics = [#tpu.dimension_semantics<parallel>], iteration_bounds = array<i64: 2>, scalar_prefetch = 0 : i64, scratch_operands = 0 : i64, tpu.core_type = #tpu.core_type<tc>, window_params = [{transform_indices = @transform_0, window_bounds = array<i64: 8, 1>}, {pipeline_mode = #tpu.pipeline_mode<synchronous>, transform_indices = @transform_1, window_bounds = array<i64: 64, 128>}, {transform_indices = @transform_2, window_bounds = array<i64: 8, 128>}]} {
    %c0 = arith.constant 0 : index
    %c0_0 = arith.constant 0 : index
    %0 = vector.load %arg1[%c0, %c0_0] : memref<8x1xi32, #tpu.memory_space<vmem>>, vector<8x1xi32>
    %cst = arith.constant 0.000000e+00 : f32
    %1 = vector.broadcast %cst : f32 to vector<8x128xf32>
    %c0_1 = arith.constant 0 : index
    %c0_2 = arith.constant 0 : index
    %2 = vector.load %arg2[%c0_1, %c0_2] : memref<64x128xf32, #tpu.memory_space<vmem>>, vector<64x128xf32>
    %3 = tpu.iota {dimensions = array<i32: 1>} : vector<8x64xi32>
    %c0_i32 = arith.constant 0 : i32
    %4 = vector.broadcast %c0_i32 : i32 to vector<8x64xi32>
    %5 = arith.addi %3, %4 : vector<8x64xi32>
    %6 = vector.broadcast %0 : vector<8x1xi32> to vector<8x64xi32>
    %7 = arith.cmpi eq, %6, %5 : vector<8x64xi32>
    %cst_3 = arith.constant 1.000000e+00 : f32
    %cst_4 = arith.constant 0.000000e+00 : f32
    %8 = vector.broadcast %cst_3 : f32 to vector<8x64xf32>
    %9 = vector.broadcast %cst_4 : f32 to vector<8x64xf32>
    %10 = arith.select %7, %8, %9 : vector<8x64xi1>, vector<8x64xf32>
    %cst_5 = arith.constant dense<0.000000e+00> : vector<8x128xf32>
    %11 = tpu.matmul %10, %2, %cst_5 {dimension_numbers = #tpu.dot_dimension_numbers<[1], [0], [0], [1], [0, 0, 1, 1], [], []>, precision = #tpu.contract_precision<fp32>} : vector<8x64xf32>, vector<64x128xf32>, vector<8x128xf32> -> vector<8x128xf32>
    %12 = arith.addf %1, %11 : vector<8x128xf32>
    %c0_6 = arith.constant 0 : index
    %c0_7 = arith.constant 0 : index
    %13 = vector.load %arg3[%c0_6, %c0_7] : memref<8x128xf32, #tpu.memory_space<vmem>>, vector<8x128xf32>
    tpu.vector_store %arg3[%c0_6, %c0_7], %12 {strides = array<i32>} : memref<8x128xf32, #tpu.memory_space<vmem>>, vector<8x128xf32>,
    return
  }
  func.func @transform_0(%arg0: i32) -> (i32, i32) {
    %c0_i32 = arith.constant 0 : i32
    %c0_i32_0 = arith.constant 0 : i32
    return %arg0, %c0_i32 : i32, i32
  }
  func.func @transform_1(%arg0: i32) -> (i32, i32) {
    %c0_i32 = arith.constant 0 : i32
    %c0_i32_0 = arith.constant 0 : i32
    %c0_i32_1 = arith.constant 0 : i32
    return %c0_i32, %c0_i32_0 : i32, i32
  }
  func.func @transform_2(%arg0: i32) -> (i32, i32) {
    %c0_i32 = arith.constant 0 : i32
    %c0_i32_0 = arith.constant 0 : i32
    return %arg0, %c0_i32 : i32, i32
  }
}

</mosaic_0001>

<llo_original>
// kernel: tpu_custom_call.1
$region0: #{tpu_custom_call.1}
  #allocation0 [shape = 'u32[]', space=smem, size = 0x4, offset = 0x4, fixed_abs, tag = 'smem constant byte address 0x4 - core index']
  #allocation1 [shape = 'u32[144,128]{1,0:T(1,128)}', space=vmem, size = 0x12000, scoped, tag = 'internal scratch']
  %s0 = inlined_call_operand.vmem [shape: s32[16,1], index: 0, kind: input, shape index: {}]
  %s1 = inlined_call_operand.hbm [shape: f32[64,128], index: 1, kind: input, shape index: {}]
  %s2 = inlined_call_operand.hbm [shape: f32[16,128], index: 2, kind: output, shape index: {}]
  %s3 = sld [smem:[#allocation0]]
  $region45: #{tpu_custom_call.1} parent=0
    _
  %s5 = ssub.s32 1, %s3
  %s6 = scalar_select 0, %s5, %s3
  $region1: #{tpu_custom_call.1} parent=0
    #allocation2 [shape = 'u8[32768]{0}', space=vmem, size = 0x8000, scoped, tag = 'input window, operand 1, single buffered']
    #allocation3 [shape = 's32[2]{0}', space=sflag, size = 0x8, scoped, tag = 'scoped memory for tpu_custom_call.1']
    #allocation4 [shape = 's32[2]{0}', space=sflag, size = 0x8, scoped, tag = 'scoped memory for tpu_custom_call.1']
    #allocation5 [shape = 'u8[8192]{0}', space=vmem, size = 0x2000, scoped, tag = 'output window, operand 0']
    %7 = vsyncpa [#allocation3], 0
    %8 = vsyncpa [#allocation4], 0
    %s9 = scalar_lea.sflag [#allocation4], 1
    %10 = vsyncpa %s9, 0
    loop: start=0, step=1, limit=4
    $region2: #{tpu_custom_call.1} parent=1 // loop_pre_header
      _
    $region3: #{tpu_custom_call.1} parent=1 // loop_header
      %s12 = sphi 0, %s16
      %p13 = scmp.ge.s32.totalorder %s12, 4
      %s22 = sphi 0, %s24
      %s25 = sphi 0, %s22
      %s26 = sphi 0, %s25
      %s42 = sphi 0, %s26
      %s46 = sphi 0, %s46
      %s48 = sphi 0, %s46
      %s49 = sphi 0, %s48
      %s63 = sphi 0, %s49
      %s69 = sphi 0, %s71
      %s72 = sphi 0, %s69
      %s73 = sphi 0, %s72
      %s89 = sphi 0, %s73
    $region4: #{tpu_custom_call.1} parent=1 // loop_header_branch
      %15 = sbr.rel (%p13) target = $region8
    $region5: #{tpu_custom_call.1} parent=1 // loop_body
      %s17 = ssub.s32 %s12, 1
      %s18 = ssub.s32 %s12, 2
      %s19 = sadd.s32 %s12, 1
      %s20 = ssub.s32 %s12, %s19
      %p21 = scmp.eq.s32.totalorder %s20, 0
      %s23 = sadd.s32 %s22, 1
      %s24 = scalar_select %p21, %s22, %s23
      %p27 = pneg %p21
      %p28 = scmp.eq.s32.totalorder %s12, 1
      %p29 = por %p27, %p28
      %p30 = scmp.ne.s32.totalorder %s22, %s25
      %p31 = scmp.eq.s32.totalorder %s12, 0
      %p32 = por %p30, %p31
      %p33 = scmp.ne.s32.totalorder %s22, %s25
      %p34 = scmp.eq.s32.totalorder %s17, 1
      %p35 = por %p33, %p34
      %p36 = scmp.ne.s32.totalorder %s25, %s26
      %p37 = scmp.eq.s32.totalorder %s17, 0
      %p38 = por %p36, %p37
      %p39 = scmp.ne.s32.totalorder %s25, %s26
      %p40 = scmp.eq.s32.totalorder %s18, 1
      %p41 = por %p39, %p40
      %p43 = scmp.ne.s32.totalorder %s26, %s42
      %p44 = scmp.eq.s32.totalorder %s18, 0
      %p45 = por %p43, %p44
      %s47 = sadd.s32 %s46, 1
      %p50 = scmp.eq.s32.totalorder %s12, 1
      %p51 = scmp.ne.s32.totalorder %s46, %s48
      %p52 = scmp.eq.s32.totalorder %s12, 0
      %p53 = por %p51, %p52
      %p54 = scmp.ne.s32.totalorder %s46, %s48
      %p55 = scmp.eq.s32.totalorder %s17, 1
      %p56 = por %p54, %p55
      %p57 = scmp.ne.s32.totalorder %s48, %s49
      %p58 = scmp.eq.s32.totalorder %s17, 0
      %p59 = por %p57, %p58
      %p60 = scmp.ne.s32.totalorder %s48, %s49
      %p61 = scmp.eq.s32.totalorder %s18, 1
      %p62 = por %p60, %p61
      %p64 = scmp.ne.s32.totalorder %s49, %s63
      %p65 = scmp.eq.s32.totalorder %s18, 0
      %p66 = por %p64, %p65
      %s67 = ssub.s32 %s12, %s19
      %p68 = scmp.eq.s32.totalorder %s67, 0
      %s70 = sadd.s32 %s69, 1
      %s71 = scalar_select %p68, %s69, %s70
      %p74 = pneg %p68
      %p75 = scmp.eq.s32.totalorder %s12, 1
      %p76 = por %p74, %p75
      %p77 = scmp.ne.s32.totalorder %s69, %s72
      %p78 = scmp.eq.s32.totalorder %s12, 0
      %p79 = por %p77, %p78
      %p80 = scmp.ne.s32.totalorder %s69, %s72
      %p81 = scmp.eq.s32.totalorder %s17, 1
      %p82 = por %p80, %p81
      %p83 = scmp.ne.s32.totalorder %s72, %s73
      %p84 = scmp.eq.s32.totalorder %s17, 0
      %p85 = por %p83, %p84
      %p86 = scmp.ne.s32.totalorder %s72, %s73
      %p87 = scmp.eq.s32.totalorder %s18, 1
      %p88 = por %p86, %p87
      %p90 = scmp.ne.s32.totalorder %s73, %s89
      %p91 = scmp.eq.s32.totalorder %s18, 0
      %p92 = por %p90, %p91
      %p93 = scmp.le.s32.totalorder 1, %s12
      %p94 = scmp.lt.s32.totalorder %s12, 3
      %p95 = pnand %p93, %p94
      %p96 = pneg %p95
      // Predicated region
      $region9: #{tpu_custom_call.1} parent=5 // pred_check
        _
      $region10: #{tpu_custom_call.1} parent=5 // pred_check_branch
        %98 = sbr.rel (%p95) target = $region12
      $region11: #{tpu_custom_call.1} parent=5 // pred_region
        %s99 = ssub.s32 %s12, 1
        // Predicated region
        $region13: #{tpu_custom_call.1} parent=11 // pred_check
          %p100 = pneg %p59
        $region14: #{tpu_custom_call.1} parent=11 // pred_check_branch
          %102 = sbr.rel (%p100) target = $region16
        $region15: #{tpu_custom_call.1} parent=11 // pred_region
          %s104 = ssub.s32 1024, 1024
          %105 = vsyncadd [#allocation3], %s104
          %s106 = sshll.u32 [#allocation2], 4
          %s107 = int_to_ptr.vmem [resolvable:$true] %s106
          %112 = dma.hbm_to_vmem [thread:$0]  %s1, 1024, %s107, [#allocation3], 128, 128, 8
        $region16: #{tpu_custom_call.1} parent=11 // pred_fallthru
          _
      $region12: #{tpu_custom_call.1} parent=5 // pred_fallthru
        _
      %p113 = scmp.lt.s32.totalorder %s12, 2
      // Predicated region
      $region17: #{tpu_custom_call.1} parent=5 // pred_check
        %p114 = pneg %p113
      $region18: #{tpu_custom_call.1} parent=5 // pred_check_branch
        %116 = sbr.rel (%p114) target = $region20
      $region19: #{tpu_custom_call.1} parent=5 // pred_region
        // Predicated region
        $region21: #{tpu_custom_call.1} parent=19 // pred_check
          %p117 = pneg %p32
        $region22: #{tpu_custom_call.1} parent=19 // pred_check_branch
          %119 = sbr.rel (%p117) target = $region24
        $region23: #{tpu_custom_call.1} parent=19 // pred_region
          %p120 = scmp.lt.s32.totalorder %s12, 1
          %s121 = scalar_select %p120, %s12, 1
          %s122 = smul.addr %s121, 8
          %s123 = scalar_lea.vmem %s0, %s122
        $region24: #{tpu_custom_call.1} parent=19 // pred_fallthru
          _
      $region20: #{tpu_custom_call.1} parent=5 // pred_fallthru
        _
      %p124 = scmp.le.s32.totalorder 1, %s12
      %p125 = scmp.lt.s32.totalorder %s12, 3
      %p126 = pnand %p124, %p125
      %p127 = pneg %p126
      // Predicated region
      $region25: #{tpu_custom_call.1} parent=5 // pred_check
        _
      $region26: #{tpu_custom_call.1} parent=5 // pred_check_branch
        %129 = sbr.rel (%p126) target = $region28
      $region27: #{tpu_custom_call.1} parent=5 // pred_region
        %s130 = ssub.s32 %s12, 1
        // Predicated region
        $region29: #{tpu_custom_call.1} parent=27 // pred_check
          %p131 = pneg %p59
        $region30: #{tpu_custom_call.1} parent=27 // pred_check_branch
          %133 = sbr.rel (%p131) target = $region32
        $region31: #{tpu_custom_call.1} parent=27 // pred_region
          %134 = dma.done [#allocation3], 1024
        $region32: #{tpu_custom_call.1} parent=27 // pred_fallthru
          _
        %p135 = scmp.lt.s32.totalorder %s17, 1
        %s136 = scalar_select %p135, %s17, 1
        %s137 = smul.addr %s136, 8
        %s138 = scalar_lea.vmem %s0, %s137
        %p139 = pneg %p38
        %p140 = pneg %p35
        %p141 = pneg %p59
        %p142 = pneg %p56
        %p143 = pneg %p85
        %p144 = pneg %p82
        %s145 = sand.u32 %s72, 1
        %s146 = scalar_lea.sflag [#allocation4], %s145
        %s147 = sand.u32 %s72, 1
        %s148 = smul.addr %s147, 8
        %s149 = scalar_lea.vmem [#allocation5], %s148
        %p150 = scmp.lt.s32.totalorder %s17, 1
        %s151 = scalar_select %p150, %s17, 1
        %s152 = smul.addr %s151, 8
        %s153 = scalar_lea.vmem %s0, %s152
        %v154 = vld [vmem:[%s153] sm:$0xff]
        %v155 = vld [vmem:[#allocation2] sm:$0xff]
        %v156 = vld [vmem:[#allocation2 + $0x8] sm:$0xff]
        %v157 = vld [vmem:[#allocation2 + $0x10] sm:$0xff]
        %v158 = vld [vmem:[#allocation2 + $0x18] sm:$0xff]
        %v159 = vld [vmem:[#allocation2 + $0x20] sm:$0xff]
        %v160 = vld [vmem:[#allocation2 + $0x28] sm:$0xff]
        %v161 = vld [vmem:[#allocation2 + $0x30] sm:$0xff]
        %v162 = vld [vmem:[#allocation2 + $0x38] sm:$0xff]
        %v163 = vlaneseq
        %v164 = vand.u32 %v163, 127
        %165 = vset.pattern.permute.xlu0 0
        %166 = vperm.xlu0 %165, %v154
        %v167 = vpop.permute.xlu0 %166
        %vm168 = vcmp.eq.s32.totalorder %v167, %v164
        %v169 = vsel %vm168, 1.0, 0.0
        %vm170 = vcmask 523264
        %v172 = vsel %vm170, %v169, 0
        %174 = vmatprep.subr.mxu0 0.0
        %v175 = vand.u32 %v155, 4294901760
        %176 = vmatpush1.msra.mxu0 %v175
        %177 = vmatprep.subr.mxu0 0.0
        %v178 = vand.u32 %v156, 4294901760
        %179 = vmatpush1.msra.mxu0 %v178
        %180 = vmatprep.subr.mxu0 0.0
        %v181 = vand.u32 %v157, 4294901760
        %182 = vmatpush1.msra.mxu0 %v181
        %183 = vmatprep.subr.mxu0 0.0
        %v184 = vand.u32 %v158, 4294901760
        %185 = vmatpush1.msra.mxu0 %v184
        %186 = vmatprep.subr.mxu0 0.0
        %v187 = vand.u32 %v159, 4294901760
        %188 = vmatpush1.msra.mxu0 %v187
        %189 = vmatprep.subr.mxu0 0.0
        %v190 = vand.u32 %v160, 4294901760
        %191 = vmatpush1.msra.mxu0 %v190
        %192 = vmatprep.subr.mxu0 0.0
        %v193 = vand.u32 %v161, 4294901760
        %194 = vmatpush1.msra.mxu0 %v193
        %195 = vmatprep.subr.mxu0 0.0
        %v196 = vand.u32 %v162, 4294901760
        %197 = vmatpush1.msra.mxu0 %v196
        %198 = vmatprep.subr.mxu0 0.0
        %199 = vmatpush1.msra.mxu0 0.0
        %200 = vmatprep.subr.mxu0 0.0
        %201 = vmatpush1.msra.mxu0 0.0
        %202 = vmatprep.subr.mxu0 0.0
        %203 = vmatpush1.msra.mxu0 0.0
        %204 = vmatprep.subr.mxu0 0.0
        %205 = vmatpush1.msra.mxu0 0.0
        %206 = vmatprep.subr.mxu0 0.0
        %207 = vmatpush1.msra.mxu0 0.0
        %208 = vmatprep.subr.mxu0 0.0
        %209 = vmatpush1.msra.mxu0 0.0
        %210 = vmatprep.subr.mxu0 0.0
        %211 = vmatpush1.msra.mxu0 0.0
        %212 = vmatprep.subr.mxu0 0.0
        %213 = vmatpush1.msra.mxu0 0.0
        %214 = vmatprep.subr.mxu0 0.0
        %215 = vmatpush1.msra.mxu0 0.0
        %216 = vmatprep.subr.mxu0 0.0
        %217 = vmatpush1.msra.mxu0 0.0
        %218 = vmatprep.subr.mxu0 0.0
        %219 = vmatpush1.msra.mxu0 0.0
        %220 = vmatprep.subr.mxu0 0.0
        %221 = vmatpush1.msra.mxu0 0.0
        %222 = vmatprep.subr.mxu0 0.0
        %223 = vmatpush1.msra.mxu0 0.0
        %224 = vmatprep.subr.mxu0 0.0
        %225 = vmatpush1.msra.mxu0 0.0
        %226 = vmatprep.subr.mxu0 0.0
        %227 = vmatpush1.msra.mxu0 0.0
        %228 = vmatprep.subr.mxu0 0.0
        %229 = vmatpush1.msra.mxu0 0.0
        %230 = vmatprep.subr.mxu0 0.0
        %231 = vmatpush1.msra.mxu0 0.0
        %232 = vmatprep.subr.mxu0 0.0
        %233 = vmatpush1.msra.mxu0 0.0
        %234 = vmatprep.subr.mxu0 0.0
        %235 = vmatpush1.msra.mxu0 0.0
        %236 = vmatprep.subr.mxu0 0.0
        %237 = vmatpush1.msra.mxu0 0.0
        %238 = vmatprep.subr.mxu0 0.0
        %239 = vmatpush1.msra.mxu0 0.0
        %240 = vmatprep.subr.mxu0 0.0
        %241 = vmatpush1.msra.mxu0 0.0
        %242 = vmatprep.subr.mxu0 0.0
        %243 = vmatpush1.msra.mxu0 0.0
        %244 = vmatprep.subr.mxu0 0.0
        %245 = vmatpush1.msra.mxu0 0.0
        %246 = vmatprep.mubr.f32.mxu0 0.0
        %v247 = vand.u32 %v172, 4294901760
        %v248 = vsub.f32 %v172, %v247
        %v249 = vand.u32 %v248, 4294901760
        %v250 = vsub.f32 %v248, %v249
        %v251 = vand.u32 %v250, 4294901760
        %252 = vmatmul.mubr.f32.gmra.mrb[0].mxu0 %v251
        %v253 = vpop.f32.mrb[0].mxu0
        %v254 = vadd.f32 0.0, %v253
        %v255 = vpop.f32.mrb[0].mxu0
        %256 = vdwg.mxu0
        %257 = vmatprep.subr.mxu0 0.0
        %v258 = vand.u32 %v155, 4294901760
        %v259 = vsub.f32 %v155, %v258
        %v260 = vand.u32 %v259, 4294901760
        %v261 = vsub.f32 %v259, %v260
        %v262 = vand.u32 %v261, 4294901760
        %263 = vmatpush1.msra.mxu0 %v262
        %264 = vmatprep.subr.mxu0 0.0
        %v265 = vand.u32 %v156, 4294901760
        %v266 = vsub.f32 %v156, %v265
        %v267 = vand.u32 %v266, 4294901760
        %v268 = vsub.f32 %v266, %v267
        %v269 = vand.u32 %v268, 4294901760
        %270 = vmatpush1.msra.mxu0 %v269
        %271 = vmatprep.subr.mxu0 0.0
        %v272 = vand.u32 %v157, 4294901760
        %v273 = vsub.f32 %v157, %v272
        %v274 = vand.u32 %v273, 4294901760
        %v275 = vsub.f32 %v273, %v274
        %v276 = vand.u32 %v275, 4294901760
        %277 = vmatpush1.msra.mxu0 %v276
        %278 = vmatprep.subr.mxu0 0.0
        %v279 = vand.u32 %v158, 4294901760
        %v280 = vsub.f32 %v158, %v279
        %v281 = vand.u32 %v280, 4294901760
        %v282 = vsub.f32 %v280, %v281
        %v283 = vand.u32 %v282, 4294901760
        %284 = vmatpush1.msra.mxu0 %v283
        %285 = vmatprep.subr.mxu0 0.0
        %v286 = vand.u32 %v159, 4294901760
        %v287 = vsub.f32 %v159, %v286
        %v288 = vand.u32 %v287, 4294901760
        %v289 = vsub.f32 %v287, %v288
        %v290 = vand.u32 %v289, 4294901760
        %291 = vmatpush1.msra.mxu0 %v290
        %292 = vmatprep.subr.mxu0 0.0
        %v293 = vand.u32 %v160, 4294901760
        %v294 = vsub.f32 %v160, %v293
        %v295 = vand.u32 %v294, 4294901760
        %v296 = vsub.f32 %v294, %v295
        %v297 = vand.u32 %v296, 4294901760
        %298 = vmatpush1.msra.mxu0 %v297
        %299 = vmatprep.subr.mxu0 0.0
        %v300 = vand.u32 %v161, 4294901760
        %v301 = vsub.f32 %v161, %v300
        %v302 = vand.u32 %v301, 4294901760
        %v303 = vsub.f32 %v301, %v302
        %v304 = vand.u32 %v303, 4294901760
        %305 = vmatpush1.msra.mxu0 %v304
        %306 = vmatprep.subr.mxu0 0.0
        %v307 = vand.u32 %v162, 4294901760
        %v308 = vsub.f32 %v162, %v307
        %v309 = vand.u32 %v308, 4294901760
        %v310 = vsub.f32 %v308, %v309
        %v311 = vand.u32 %v310, 4294901760
        %312 = vmatpush1.msra.mxu0 %v311
        %313 = vmatprep.subr.mxu0 0.0
        %314 = vmatpush1.msra.mxu0 0.0
        %315 = vmatprep.subr.mxu0 0.0
        %316 = vmatpush1.msra.mxu0 0.0
        %317 = vmatprep.subr.mxu0 0.0
        %318 = vmatpush1.msra.mxu0 0.0
        %319 = vmatprep.subr.mxu0 0.0
        %320 = vmatpush1.msra.mxu0 0.0
        %321 = vmatprep.subr.mxu0 0.0
        %322 = vmatpush1.msra.mxu0 0.0
        %323 = vmatprep.subr.mxu0 0.0
        %324 = vmatpush1.msra.mxu0 0.0
        %325 = vmatprep.subr.mxu0 0.0
        %326 = vmatpush1.msra.mxu0 0.0
        %327 = vmatprep.subr.mxu0 0.0
        %328 = vmatpush1.msra.mxu0 0.0
        %329 = vmatprep.subr.mxu0 0.0
        %330 = vmatpush1.msra.mxu0 0.0
        %331 = vmatprep.subr.mxu0 0.0
        %332 = vmatpush1.msra.mxu0 0.0
        %333 = vmatprep.subr.mxu0 0.0
        %334 = vmatpush1.msra.mxu0 0.0
        %335 = vmatprep.subr.mxu0 0.0
        %336 = vmatpush1.msra.mxu0 0.0
        %337 = vmatprep.subr.mxu0 0.0
        %338 = vmatpush1.msra.mxu0 0.0
        %339 = vmatprep.subr.mxu0 0.0
        %340 = vmatpush1.msra.mxu0 0.0
        %341 = vmatprep.subr.mxu0 0.0
        %342 = vmatpush1.msra.mxu0 0.0
        %343 = vmatprep.subr.mxu0 0.0
        %344 = vmatpush1.msra.mxu0 0.0
        %345 = vmatprep.subr.mxu0 0.0
        %346 = vmatpush1.msra.mxu0 0.0
        %347 = vmatprep.subr.mxu0 0.0
        %348 = vmatpush1.msra.mxu0 0.0
        %349 = vmatprep.subr.mxu0 0.0
        %350 = vmatpush1.msra.mxu0 0.0
        %351 = vmatprep.subr.mxu0 0.0
        %352 = vmatpush1.msra.mxu0 0.0
        %353 = vmatprep.subr.mxu0 0.0
        %354 = vmatpush1.msra.mxu0 0.0
        %355 = vmatprep.subr.mxu0 0.0
        %356 = vmatpush1.msra.mxu0 0.0
        %357 = vmatprep.subr.mxu0 0.0
        %358 = vmatpush1.msra.mxu0 0.0
        %359 = vmatprep.subr.mxu0 0.0
        %360 = vmatpush1.msra.mxu0 0.0
        %361 = vmatprep.mubr.f32.mxu0 0.0
        %v362 = vand.u32 %v172, 4294901760
        %363 = vmatmul.mubr.f32.gmra.mrb[0].mxu0 %v362
        %v364 = vpop.f32.mrb[0].mxu0
        %v365 = vadd.f32 %v254, %v364
        %v366 = vpop.f32.mrb[0].mxu0
        %367 = vdwg.mxu0
        %368 = vmatprep.subr.mxu0 0.0
        %v369 = vand.u32 %v155, 4294901760
        %v370 = vsub.f32 %v155, %v369
        %371 = vmatpush1.msra.mxu0 %v370
        %372 = vmatprep.subr.mxu0 0.0
        %v373 = vand.u32 %v156, 4294901760
        %v374 = vsub.f32 %v156, %v373
        %375 = vmatpush1.msra.mxu0 %v374
        %376 = vmatprep.subr.mxu0 0.0
        %v377 = vand.u32 %v157, 4294901760
        %v378 = vsub.f32 %v157, %v377
        %379 = vmatpush1.msra.mxu0 %v378
        %380 = vmatprep.subr.mxu0 0.0
        %v381 = vand.u32 %v158, 4294901760
        %v382 = vsub.f32 %v158, %v381
        %383 = vmatpush1.msra.mxu0 %v382
        %384 = vmatprep.subr.mxu0 0.0
        %v385 = vand.u32 %v159, 4294901760
        %v386 = vsub.f32 %v159, %v385
        %387 = vmatpush1.msra.mxu0 %v386
        %388 = vmatprep.subr.mxu0 0.0
        %v389 = vand.u32 %v160, 4294901760
        %v390 = vsub.f32 %v160, %v389
        %391 = vmatpush1.msra.mxu0 %v390
        %392 = vmatprep.subr.mxu0 0.0
        %v393 = vand.u32 %v161, 4294901760
        %v394 = vsub.f32 %v161, %v393
        %395 = vmatpush1.msra.mxu0 %v394
        %396 = vmatprep.subr.mxu0 0.0
        %v397 = vand.u32 %v162, 4294901760
        %v398 = vsub.f32 %v162, %v397
        %399 = vmatpush1.msra.mxu0 %v398
        %400 = vmatprep.subr.mxu0 0.0
        %401 = vmatpush1.msra.mxu0 0.0
        %402 = vmatprep.subr.mxu0 0.0
        %403 = vmatpush1.msra.mxu0 0.0
        %404 = vmatprep.subr.mxu0 0.0
        %405 = vmatpush1.msra.mxu0 0.0
        %406 = vmatprep.subr.mxu0 0.0
        %407 = vmatpush1.msra.mxu0 0.0
        %408 = vmatprep.subr.mxu0 0.0
        %409 = vmatpush1.msra.mxu0 0.0
        %410 = vmatprep.subr.mxu0 0.0
        %411 = vmatpush1.msra.mxu0 0.0
        %412 = vmatprep.subr.mxu0 0.0
        %413 = vmatpush1.msra.mxu0 0.0
        %414 = vmatprep.subr.mxu0 0.0
        %415 = vmatpush1.msra.mxu0 0.0
        %416 = vmatprep.subr.mxu0 0.0
        %417 = vmatpush1.msra.mxu0 0.0
        %418 = vmatprep.subr.mxu0 0.0
        %419 = vmatpush1.msra.mxu0 0.0
        %420 = vmatprep.subr.mxu0 0.0
        %421 = vmatpush1.msra.mxu0 0.0
        %422 = vmatprep.subr.mxu0 0.0
        %423 = vmatpush1.msra.mxu0 0.0
        %424 = vmatprep.subr.mxu0 0.0
        %425 = vmatpush1.msra.mxu0 0.0
        %426 = vmatprep.subr.mxu0 0.0
        %427 = vmatpush1.msra.mxu0 0.0
        %428 = vmatprep.subr.mxu0 0.0
        %429 = vmatpush1.msra.mxu0 0.0
        %430 = vmatprep.subr.mxu0 0.0
        %431 = vmatpush1.msra.mxu0 0.0
        %432 = vmatprep.subr.mxu0 0.0
        %433 = vmatpush1.msra.mxu0 0.0
        %434 = vmatprep.subr.mxu0 0.0
        %435 = vmatpush1.msra.mxu0 0.0
        %436 = vmatprep.subr.mxu0 0.0
        %437 = vmatpush1.msra.mxu0 0.0
        %438 = vmatprep.subr.mxu0 0.0
        %439 = vmatpush1.msra.mxu0 0.0
        %440 = vmatprep.subr.mxu0 0.0
        %441 = vmatpush1.msra.mxu0 0.0
        %442 = vmatprep.subr.mxu0 0.0
        %443 = vmatpush1.msra.mxu0 0.0
        %444 = vmatprep.subr.mxu0 0.0
        %445 = vmatpush1.msra.mxu0 0.0
        %446 = vmatprep.subr.mxu0 0.0
        %447 = vmatpush1.msra.mxu0 0.0
        %448 = vmatprep.mubr.f32.mxu0 0.0
        %v449 = vand.u32 %v172, 4294901760
        %v450 = vsub.f32 %v172, %v449
        %451 = vmatmul.mubr.f32.gmra.mrb[0].mxu0 %v450
        %v452 = vpop.f32.mrb[0].mxu0
        %v453 = vadd.f32 %v365, %v452
        %v454 = vpop.f32.mrb[0].mxu0
        %455 = vdwg.mxu0
        %456 = vmatprep.subr.mxu0 0.0
        %v457 = vand.u32 %v155, 4294901760
        %458 = vmatpush1.msra.mxu0 %v457
        %459 = vmatprep.subr.mxu0 0.0
        %v460 = vand.u32 %v156, 4294901760
        %461 = vmatpush1.msra.mxu0 %v460
        %462 = vmatprep.subr.mxu0 0.0
        %v463 = vand.u32 %v157, 4294901760
        %464 = vmatpush1.msra.mxu0 %v463
        %465 = vmatprep.subr.mxu0 0.0
        %v466 = vand.u32 %v158, 4294901760
        %467 = vmatpush1.msra.mxu0 %v466
        %468 = vmatprep.subr.mxu0 0.0
        %v469 = vand.u32 %v159, 4294901760
        %470 = vmatpush1.msra.mxu0 %v469
        %471 = vmatprep.subr.mxu0 0.0
        %v472 = vand.u32 %v160, 4294901760
        %473 = vmatpush1.msra.mxu0 %v472
        %474 = vmatprep.subr.mxu0 0.0
        %v475 = vand.u32 %v161, 4294901760
        %476 = vmatpush1.msra.mxu0 %v475
        %477 = vmatprep.subr.mxu0 0.0
        %v478 = vand.u32 %v162, 4294901760
        %479 = vmatpush1.msra.mxu0 %v478
        %480 = vmatprep.subr.mxu0 0.0
        %481 = vmatpush1.msra.mxu0 0.0
        %482 = vmatprep.subr.mxu0 0.0
        %483 = vmatpush1.msra.mxu0 0.0
        %484 = vmatprep.subr.mxu0 0.0
        %485 = vmatpush1.msra.mxu0 0.0
        %486 = vmatprep.subr.mxu0 0.0
        %487 = vmatpush1.msra.mxu0 0.0
        %488 = vmatprep.subr.mxu0 0.0
        %489 = vmatpush1.msra.mxu0 0.0
        %490 = vmatprep.subr.mxu0 0.0
        %491 = vmatpush1.msra.mxu0 0.0
        %492 = vmatprep.subr.mxu0 0.0
        %493 = vmatpush1.msra.mxu0 0.0
        %494 = vmatprep.subr.mxu0 0.0
        %495 = vmatpush1.msra.mxu0 0.0
        %496 = vmatprep.subr.mxu0 0.0
        %497 = vmatpush1.msra.mxu0 0.0
        %498 = vmatprep.subr.mxu0 0.0
        %499 = vmatpush1.msra.mxu0 0.0
        %500 = vmatprep.subr.mxu0 0.0
        %501 = vmatpush1.msra.mxu0 0.0
        %502 = vmatprep.subr.mxu0 0.0
        %503 = vmatpush1.msra.mxu0 0.0
        %504 = vmatprep.subr.mxu0 0.0
        %505 = vmatpush1.msra.mxu0 0.0
        %506 = vmatprep.subr.mxu0 0.0
        %507 = vmatpush1.msra.mxu0 0.0
        %508 = vmatprep.subr.mxu0 0.0
        %509 = vmatpush1.msra.mxu0 0.0
        %510 = vmatprep.subr.mxu0 0.0
        %511 = vmatpush1.msra.mxu0 0.0
        %512 = vmatprep.subr.mxu0 0.0
        %513 = vmatpush1.msra.mxu0 0.0
        %514 = vmatprep.subr.mxu0 0.0
        %515 = vmatpush1.msra.mxu0 0.0
        %516 = vmatprep.subr.mxu0 0.0
        %517 = vmatpush1.msra.mxu0 0.0
        %518 = vmatprep.subr.mxu0 0.0
        %519 = vmatpush1.msra.mxu0 0.0
        %520 = vmatprep.subr.mxu0 0.0
        %521 = vmatpush1.msra.mxu0 0.0
        %522 = vmatprep.subr.mxu0 0.0
        %523 = vmatpush1.msra.mxu0 0.0
        %524 = vmatprep.subr.mxu0 0.0
        %525 = vmatpush1.msra.mxu0 0.0
        %526 = vmatprep.subr.mxu0 0.0
        %527 = vmatpush1.msra.mxu0 0.0
        %528 = vmatprep.mubr.f32.mxu0 0.0
        %v529 = vand.u32 %v172, 4294901760
        %v530 = vsub.f32 %v172, %v529
        %v531 = vand.u32 %v530, 4294901760
        %532 = vmatmul.mubr.f32.gmra.mrb[0].mxu0 %v531
        %v533 = vpop.f32.mrb[0].mxu0
        %v534 = vadd.f32 %v453, %v533
        %v535 = vpop.f32.mrb[0].mxu0
        %536 = vdwg.mxu0
        %537 = vmatprep.subr.mxu0 0.0
        %v538 = vand.u32 %v155, 4294901760
        %v539 = vsub.f32 %v155, %v538
        %v540 = vand.u32 %v539, 4294901760
        %541 = vmatpush1.msra.mxu0 %v540
        %542 = vmatprep.subr.mxu0 0.0
        %v543 = vand.u32 %v156, 4294901760
        %v544 = vsub.f32 %v156, %v543
        %v545 = vand.u32 %v544, 4294901760
        %546 = vmatpush1.msra.mxu0 %v545
        %547 = vmatprep.subr.mxu0 0.0
        %v548 = vand.u32 %v157, 4294901760
        %v549 = vsub.f32 %v157, %v548
        %v550 = vand.u32 %v549, 4294901760
        %551 = vmatpush1.msra.mxu0 %v550
        %552 = vmatprep.subr.mxu0 0.0
        %v553 = vand.u32 %v158, 4294901760
        %v554 = vsub.f32 %v158, %v553
        %v555 = vand.u32 %v554, 4294901760
        %556 = vmatpush1.msra.mxu0 %v555
        %557 = vmatprep.subr.mxu0 0.0
        %v558 = vand.u32 %v159, 4294901760
        %v559 = vsub.f32 %v159, %v558
        %v560 = vand.u32 %v559, 4294901760
        %561 = vmatpush1.msra.mxu0 %v560
        %562 = vmatprep.subr.mxu0 0.0
        %v563 = vand.u32 %v160, 4294901760
        %v564 = vsub.f32 %v160, %v563
        %v565 = vand.u32 %v564, 4294901760
        %566 = vmatpush1.msra.mxu0 %v565
        %567 = vmatprep.subr.mxu0 0.0
        %v568 = vand.u32 %v161, 4294901760
        %v569 = vsub.f32 %v161, %v568
        %v570 = vand.u32 %v569, 4294901760
        %571 = vmatpush1.msra.mxu0 %v570
        %572 = vmatprep.subr.mxu0 0.0
        %v573 = vand.u32 %v162, 4294901760
        %v574 = vsub.f32 %v162, %v573
        %v575 = vand.u32 %v574, 4294901760
        %576 = vmatpush1.msra.mxu0 %v575
        %577 = vmatprep.subr.mxu0 0.0
        %578 = vmatpush1.msra.mxu0 0.0
        %579 = vmatprep.subr.mxu0 0.0
        %580 = vmatpush1.msra.mxu0 0.0
        %581 = vmatprep.subr.mxu0 0.0
        %582 = vmatpush1.msra.mxu0 0.0
        %583 = vmatprep.subr.mxu0 0.0
        %584 = vmatpush1.msra.mxu0 0.0
        %585 = vmatprep.subr.mxu0 0.0
        %586 = vmatpush1.msra.mxu0 0.0
        %587 = vmatprep.subr.mxu0 0.0
        %588 = vmatpush1.msra.mxu0 0.0
        %589 = vmatprep.subr.mxu0 0.0
        %590 = vmatpush1.msra.mxu0 0.0
        %591 = vmatprep.subr.mxu0 0.0
        %592 = vmatpush1.msra.mxu0 0.0
        %593 = vmatprep.subr.mxu0 0.0
        %594 = vmatpush1.msra.mxu0 0.0
        %595 = vmatprep.subr.mxu0 0.0
        %596 = vmatpush1.msra.mxu0 0.0
        %597 = vmatprep.subr.mxu0 0.0
        %598 = vmatpush1.msra.mxu0 0.0
        %599 = vmatprep.subr.mxu0 0.0
        %600 = vmatpush1.msra.mxu0 0.0
        %601 = vmatprep.subr.mxu0 0.0
        %602 = vmatpush1.msra.mxu0 0.0
        %603 = vmatprep.subr.mxu0 0.0
        %604 = vmatpush1.msra.mxu0 0.0
        %605 = vmatprep.subr.mxu0 0.0
        %606 = vmatpush1.msra.mxu0 0.0
        %607 = vmatprep.subr.mxu0 0.0
        %608 = vmatpush1.msra.mxu0 0.0
        %609 = vmatprep.subr.mxu0 0.0
        %610 = vmatpush1.msra.mxu0 0.0
        %611 = vmatprep.subr.mxu0 0.0
        %612 = vmatpush1.msra.mxu0 0.0
        %613 = vmatprep.subr.mxu0 0.0
        %614 = vmatpush1.msra.mxu0 0.0
        %615 = vmatprep.subr.mxu0 0.0
        %616 = vmatpush1.msra.mxu0 0.0
        %617 = vmatprep.subr.mxu0 0.0
        %618 = vmatpush1.msra.mxu0 0.0
        %619 = vmatprep.subr.mxu0 0.0
        %620 = vmatpush1.msra.mxu0 0.0
        %621 = vmatprep.subr.mxu0 0.0
        %622 = vmatpush1.msra.mxu0 0.0
        %623 = vmatprep.subr.mxu0 0.0
        %624 = vmatpush1.msra.mxu0 0.0
        %625 = vmatprep.mubr.f32.mxu0 0.0
        %v626 = vand.u32 %v172, 4294901760
        %627 = vmatmul.mubr.f32.gmra.mrb[0].mxu0 %v626
        %v628 = vpop.f32.mrb[0].mxu0
        %v629 = vadd.f32 %v534, %v628
        %v630 = vpop.f32.mrb[0].mxu0
        %631 = vdwg.mxu0
        %632 = vmatprep.subr.mxu0 0.0
        %v633 = vand.u32 %v155, 4294901760
        %634 = vmatpush1.msra.mxu0 %v633
        %635 = vmatprep.subr.mxu0 0.0
        %v636 = vand.u32 %v156, 4294901760
        %637 = vmatpush1.msra.mxu0 %v636
        %638 = vmatprep.subr.mxu0 0.0
        %v639 = vand.u32 %v157, 4294901760
        %640 = vmatpush1.msra.mxu0 %v639
        %641 = vmatprep.subr.mxu0 0.0
        %v642 = vand.u32 %v158, 4294901760
        %643 = vmatpush1.msra.mxu0 %v642
        %644 = vmatprep.subr.mxu0 0.0
        %v645 = vand.u32 %v159, 4294901760
        %646 = vmatpush1.msra.mxu0 %v645
        %647 = vmatprep.subr.mxu0 0.0
        %v648 = vand.u32 %v160, 4294901760
        %649 = vmatpush1.msra.mxu0 %v648
        %650 = vmatprep.subr.mxu0 0.0
        %v651 = vand.u32 %v161, 4294901760
        %652 = vmatpush1.msra.mxu0 %v651
        %653 = vmatprep.subr.mxu0 0.0
        %v654 = vand.u32 %v162, 4294901760
        %655 = vmatpush1.msra.mxu0 %v654
        %656 = vmatprep.subr.mxu0 0.0
        %657 = vmatpush1.msra.mxu0 0.0
        %658 = vmatprep.subr.mxu0 0.0
        %659 = vmatpush1.msra.mxu0 0.0
        %660 = vmatprep.subr.mxu0 0.0
        %661 = vmatpush1.msra.mxu0 0.0
        %662 = vmatprep.subr.mxu0 0.0
        %663 = vmatpush1.msra.mxu0 0.0
        %664 = vmatprep.subr.mxu0 0.0
        %665 = vmatpush1.msra.mxu0 0.0
        %666 = vmatprep.subr.mxu0 0.0
        %667 = vmatpush1.msra.mxu0 0.0
        %668 = vmatprep.subr.mxu0 0.0
        %669 = vmatpush1.msra.mxu0 0.0
        %670 = vmatprep.subr.mxu0 0.0
        %671 = vmatpush1.msra.mxu0 0.0
        %672 = vmatprep.subr.mxu0 0.0
        %673 = vmatpush1.msra.mxu0 0.0
        %674 = vmatprep.subr.mxu0 0.0
        %675 = vmatpush1.msra.mxu0 0.0
        %676 = vmatprep.subr.mxu0 0.0
        %677 = vmatpush1.msra.mxu0 0.0
        %678 = vmatprep.subr.mxu0 0.0
        %679 = vmatpush1.msra.mxu0 0.0
        %680 = vmatprep.subr.mxu0 0.0
        %681 = vmatpush1.msra.mxu0 0.0
        %682 = vmatprep.subr.mxu0 0.0
        %683 = vmatpush1.msra.mxu0 0.0
        %684 = vmatprep.subr.mxu0 0.0
        %685 = vmatpush1.msra.mxu0 0.0
        %686 = vmatprep.subr.mxu0 0.0
        %687 = vmatpush1.msra.mxu0 0.0
        %688 = vmatprep.subr.mxu0 0.0
        %689 = vmatpush1.msra.mxu0 0.0
        %690 = vmatprep.subr.mxu0 0.0
        %691 = vmatpush1.msra.mxu0 0.0
        %692 = vmatprep.subr.mxu0 0.0
        %693 = vmatpush1.msra.mxu0 0.0
        %694 = vmatprep.subr.mxu0 0.0
        %695 = vmatpush1.msra.mxu0 0.0
        %696 = vmatprep.subr.mxu0 0.0
        %697 = vmatpush1.msra.mxu0 0.0
        %698 = vmatprep.subr.mxu0 0.0
        %699 = vmatpush1.msra.mxu0 0.0
        %700 = vmatprep.subr.mxu0 0.0
        %701 = vmatpush1.msra.mxu0 0.0
        %702 = vmatprep.subr.mxu0 0.0
        %703 = vmatpush1.msra.mxu0 0.0
        %704 = vmatprep.mubr.f32.mxu0 0.0
        %v705 = vand.u32 %v172, 4294901760
        %706 = vmatmul.mubr.f32.gmra.mrb[0].mxu0 %v705
        %v707 = vpop.f32.mrb[0].mxu0
        %v708 = vadd.f32 %v629, %v707
        %v709 = vpop.f32.mrb[0].mxu0
        %710 = vdwg.mxu0
        %711 = vst [vmem:[%s149] sm:$0xff] %v708
        %s712 = sand.u32 %s72, 1
        %s713 = scalar_lea.sflag [#allocation4], %s712
        %s714 = sand.u32 %s72, 1
        %s715 = smul.addr %s714, 8
        %s716 = scalar_lea.vmem [#allocation5], %s715
        // Predicated region
        $region33: #{tpu_custom_call.1} parent=27 // pred_check
          %p717 = pneg %p82
        $region34: #{tpu_custom_call.1} parent=27 // pred_check_branch
          %719 = sbr.rel (%p717) target = $region36
        $region35: #{tpu_custom_call.1} parent=27 // pred_region
          %s721 = ssub.s32 128, 128
          %722 = vsyncadd %s713, %s721
          %s723 = smul.addr %s17, 128
          %s724 = scalar_lea.hbm %s2, %s723
          %s726 = sshll.u32 %s716, 4
          %s727 = int_to_ptr.vmem [resolvable:$true] %s726
          %729 = dma.vmem_to_hbm [thread:$0]  %s727, 128, %s724, %s713
        $region36: #{tpu_custom_call.1} parent=27 // pred_fallthru
          _
      $region28: #{tpu_custom_call.1} parent=5 // pred_fallthru
        _
      %p730 = scmp.le.s32.totalorder 2, %s12
      // Predicated region
      $region37: #{tpu_custom_call.1} parent=5 // pred_check
        %p731 = pneg %p730
      $region38: #{tpu_custom_call.1} parent=5 // pred_check_branch
        %733 = sbr.rel (%p731) target = $region40
      $region39: #{tpu_custom_call.1} parent=5 // pred_region
        %s734 = ssub.s32 %s12, 2
        // Predicated region
        $region41: #{tpu_custom_call.1} parent=39 // pred_check
          %p735 = pneg %p88
        $region42: #{tpu_custom_call.1} parent=39 // pred_check_branch
          %737 = sbr.rel (%p735) target = $region44
        $region43: #{tpu_custom_call.1} parent=39 // pred_region
          %s738 = sand.u32 %s73, 1
          %s739 = scalar_lea.sflag [#allocation4], %s738
          %s740 = sand.u32 %s73, 1
          %s741 = smul.addr %s740, 8
          %s742 = scalar_lea.vmem [#allocation5], %s741
          %743 = dma.done %s739, 128
        $region44: #{tpu_custom_call.1} parent=39 // pred_fallthru
          _
      $region40: #{tpu_custom_call.1} parent=5 // pred_fallthru
        _
    $region6: #{tpu_custom_call.1} parent=1 // loop_footer
      %s16 = sadd.s32 1, %s12
    $region7: #{tpu_custom_call.1} parent=1 // loop_footer_branch
      %11 = sbr.rel target = $region3
    $region8: #{tpu_custom_call.1} parent=1 // loop_exit
      _
    %744 = vsyncpa [#allocation3], 1
    %s745 = scalar_lea.sflag [#allocation3], 1
    %746 = vsyncpa %s745, 1
    %747 = vsyncpa [#allocation4], 1
    %s748 = scalar_lea.sflag [#allocation4], 1
    %749 = vsyncpa %s748, 1

</llo_original>
